<compile_context>
chip_gen: v7x
topology: tpu7x:2x2x1
jax: 0.10.0
libtpu: 0.0.40
codegen_flags: <defaults>
</compile_context>

<pallas_src>
import functools

import jax
import jax.numpy as jnp
from jax.experimental import pallas as pl
from jax.experimental.pallas import tpu as pltpu


def _label_smoothing_kernel(pred_ref, tgt_ref, out_ref, *,
                            confidence, smooth_val, n_rows, tile_rows, n_cls):
    i = pl.program_id(0)

    # Zero the resident accumulator on the first grid step.
    @pl.when(i == 0)
    def _():
        out_ref[...] = jnp.zeros_like(out_ref)

    pred = pred_ref[...].astype(jnp.float32)          # (TB, C), f32 math
    tgt = tgt_ref[...]                                 # (TB, 1) int32

    # Numerically stable log-softmax pieces (no full logp materialization).
    m = jnp.max(pred, axis=-1, keepdims=True)          # (TB, 1)
    shifted = pred - m                                 # (TB, C)
    lse = jnp.log(jnp.sum(jnp.exp(shifted), axis=-1, keepdims=True))  # (TB, 1)

    # sum_c(logp) and logp at the target class, without building true_dist.
    cls_idx = jax.lax.broadcasted_iota(jnp.int32, pred.shape, 1)       # (TB, C)
    tgt_shift = jnp.sum(jnp.where(cls_idx == tgt, shifted, jnp.float32(0.0)),
                        axis=-1, keepdims=True)                         # (TB, 1)
    row_sum = jnp.sum(shifted, axis=-1, keepdims=True)                  # (TB, 1)

    sum_logp = row_sum - jnp.float32(n_cls) * lse                       # (TB, 1)
    logp_tgt = tgt_shift - lse                                          # (TB, 1)

    per_row = -(jnp.float32(smooth_val) * sum_logp
                + jnp.float32(confidence - smooth_val) * logp_tgt)      # (TB, 1)

    # Mask padded rows of the ragged last tile (also kills any NaN/Inf
    # produced by garbage in the OOB-padded region).
    row_idx = i * tile_rows + jax.lax.broadcasted_iota(
        jnp.int32, (tile_rows, 1), 0)
    per_row = jnp.where(row_idx < n_rows, per_row, jnp.float32(0.0))

    out_ref[...] += jnp.sum(per_row, axis=0, keepdims=True)             # (1, 1)

    # Finalize: turn the running sum into the mean over the batch.
    @pl.when(i == pl.num_programs(0) - 1)
    def _():
        out_ref[...] = out_ref[...] * jnp.float32(1.0 / n_rows)


def _pick_tile_rows(B, C, itemsize):
    # ~4 MiB per pred tile; x2 (double buffering) stays comfortably under the
    # scoped-VMEM defaults on v5e (16 MiB), v6e (32 MiB) and v7x (32 MiB).
    budget_bytes = 4 * 1024 * 1024
    tb = budget_bytes // max(1, C * itemsize)
    tb = max(8, min(tb, 1024))
    tb = (tb // 8) * 8                 # keep sublane-aligned block shape
    if B <= tb:
        return B                       # single full-batch tile (always legal)
    return tb


def label_smoothing_loss(pred, target, *, classes, smoothing=0.0):
    """Pallas TPU implementation of LabelSmoothingLoss.forward."""
    B, C = pred.shape
    assert C == classes
    confidence = 1.0 - smoothing
    smooth_val = smoothing / (classes - 1)

    tb = _pick_tile_rows(B, C, jnp.dtype(pred.dtype).itemsize)
    num_tiles = pl.cdiv(B, tb)

    kernel = functools.partial(
        _label_smoothing_kernel,
        confidence=confidence, smooth_val=smooth_val,
        n_rows=B, tile_rows=tb, n_cls=C,
    )

    out = pl.pallas_call(
        kernel,
        out_shape=jax.ShapeDtypeStruct((1, 1), jnp.float32),
        grid_spec=pltpu.PrefetchScalarGridSpec(
            num_scalar_prefetch=0,
            grid=(num_tiles,),
            in_specs=[
                pl.BlockSpec((tb, C), lambda i: (i, 0)),   # pred tile
                pl.BlockSpec((tb, 1), lambda i: (i, 0)),   # target tile
            ],
            out_specs=pl.BlockSpec((1, 1), lambda i: (0, 0)),  # resident acc
        ),
        compiler_params=pltpu.CompilerParams(
            dimension_semantics=("arbitrary",),   # reduction over batch tiles
        ),
    )(pred, target.reshape(B, 1).astype(jnp.int32))   # pred in NATIVE dtype
    return out[0, 0]


def _reference(pred, target, *, classes, smoothing):
    # pure-JAX reference mirroring the PyTorch module
    logp = jax.nn.log_softmax(pred.astype(jnp.float32), axis=-1)
    confidence = 1.0 - smoothing
    true_dist = jnp.full_like(logp, smoothing / (classes - 1))
    true_dist = true_dist.at[jnp.arange(pred.shape[0]), target].set(confidence)
    return jnp.mean(jnp.sum(-true_dist * logp, axis=-1))


if __name__ == "__main__":
    key = jax.random.PRNGKey(0)
    B, C = 8, 60          # e.g. NTU-60 action classes, small batch
    smoothing = 0.1

    k_pred, k_tgt = jax.random.split(key)
    pred = jax.random.normal(k_pred, (B, C), dtype=jnp.float32)
    target = jax.random.randint(k_tgt, (B,), 0, C, dtype=jnp.int32)

    loss = label_smoothing_loss(pred, target, classes=C, smoothing=smoothing)
    loss = jax.block_until_ready(loss)

    ref = _reference(pred, target, classes=C, smoothing=smoothing)
    assert jnp.allclose(loss, ref, rtol=1e-5, atol=1e-5), (loss, ref)

    print("KERNEL_OK")
</pallas_src>

<mosaic_0001>
module attributes {stable_mosaic.version = 11 : i64} {
  func.func @_label_smoothing_kernel(%arg0: i32, %arg1: memref<8x60xf32, #tpu.memory_space<vmem>>, %arg2: memref<8x1xi32, #tpu.memory_space<vmem>>, %arg3: memref<1x1xf32, #tpu.memory_space<vmem>>) attributes {dimension_semantics = [#tpu.dimension_semantics<arbitrary>], iteration_bounds = array<i64: 1>, scalar_prefetch = 0 : i64, scratch_operands = 0 : i64, tpu.core_type = #tpu.core_type<tc>, window_params = [{transform_indices = @transform_0, window_bounds = array<i64: 8, 60>}, {transform_indices = @transform_1, window_bounds = array<i64: 8, 1>}, {pipeline_mode = #tpu.pipeline_mode<synchronous>, transform_indices = @transform_2, window_bounds = array<i64: 1, 1>}]} {
    %c0_i32 = arith.constant 0 : i32
    %0 = arith.cmpi eq, %arg0, %c0_i32 : i32
    %1 = arith.extui %0 : i1 to i32
    %c0_i32_0 = arith.constant 0 : i32
    %2 = arith.cmpi ne, %1, %c0_i32_0 : i32
    scf.if %2 {
      %cst_21 = arith.constant 0.000000e+00 : f32
      %49 = vector.broadcast %cst_21 : f32 to vector<1x1xf32>
      %c0_22 = arith.constant 0 : index
      %c0_23 = arith.constant 0 : index
      %50 = vector.load %arg3[%c0_22, %c0_23] : memref<1x1xf32, #tpu.memory_space<vmem>>, vector<1x1xf32>
      tpu.vector_store %arg3[%c0_22, %c0_23], %49 {strides = array<i32>} : memref<1x1xf32, #tpu.memory_space<vmem>>, vector<1x1xf32>,
    } else {
    }
    %c0 = arith.constant 0 : index
    %c0_1 = arith.constant 0 : index
    %3 = vector.load %arg1[%c0, %c0_1] : memref<8x60xf32, #tpu.memory_space<vmem>>, vector<8x60xf32>
    %c0_2 = arith.constant 0 : index
    %c0_3 = arith.constant 0 : index
    %4 = vector.load %arg2[%c0_2, %c0_3] : memref<8x1xi32, #tpu.memory_space<vmem>>, vector<8x1xi32>
    %cst = arith.constant dense<0xFF800000> : vector<8xf32>
    %5 = vector.multi_reduction <maximumf>, %3, %cst [1] : vector<8x60xf32> to vector<8xf32>
    %6 = vector.shape_cast %5 : vector<8xf32> to vector<8x1xf32>
    %7 = vector.broadcast %6 : vector<8x1xf32> to vector<8x60xf32>
    %8 = arith.subf %3, %7 : vector<8x60xf32>
    %9 = math.exp %8 : vector<8x60xf32>
    %cst_4 = arith.constant dense<0.000000e+00> : vector<8xf32>
    %10 = vector.multi_reduction <add>, %9, %cst_4 [1] : vector<8x60xf32> to vector<8xf32>
    %11 = vector.shape_cast %10 : vector<8xf32> to vector<8x1xf32>
    %12 = math.log %11 : vector<8x1xf32>
    %13 = tpu.iota {dimensions = array<i32: 1>} : vector<8x60xi32>
    %14 = vector.broadcast %4 : vector<8x1xi32> to vector<8x60xi32>
    %15 = arith.cmpi eq, %13, %14 : vector<8x60xi32>
    %cst_5 = arith.constant 0.000000e+00 : f32
    %16 = vector.broadcast %cst_5 : f32 to vector<8x60xf32>
    %17 = arith.select %15, %8, %16 : vector<8x60xi1>, vector<8x60xf32>
    %cst_6 = arith.constant dense<0.000000e+00> : vector<8xf32>
    %18 = vector.multi_reduction <add>, %17, %cst_6 [1] : vector<8x60xf32> to vector<8xf32>
    %19 = vector.shape_cast %18 : vector<8xf32> to vector<8x1xf32>
    %cst_7 = arith.constant dense<0.000000e+00> : vector<8xf32>
    %20 = vector.multi_reduction <add>, %8, %cst_7 [1] : vector<8x60xf32> to vector<8xf32>
    %21 = vector.shape_cast %20 : vector<8xf32> to vector<8x1xf32>
    %cst_8 = arith.constant 6.000000e+01 : f32
    %22 = vector.broadcast %cst_8 : f32 to vector<8x1xf32>
    %23 = arith.mulf %22, %12 : vector<8x1xf32>
    %24 = arith.subf %21, %23 : vector<8x1xf32>
    %25 = arith.subf %19, %12 : vector<8x1xf32>
    %cst_9 = arith.constant 0.00169491523 : f32
    %26 = vector.broadcast %cst_9 : f32 to vector<8x1xf32>
    %27 = arith.mulf %26, %24 : vector<8x1xf32>
    %cst_10 = arith.constant 0.898305058 : f32
    %28 = vector.broadcast %cst_10 : f32 to vector<8x1xf32>
    %29 = arith.mulf %28, %25 : vector<8x1xf32>
    %30 = arith.addf %27, %29 : vector<8x1xf32>
    %cst_11 = arith.constant 0.000000e+00 : f32
    %31 = vector.broadcast %cst_11 : f32 to vector<8x1xf32>
    %32 = arith.subf %31, %30 : vector<8x1xf32>
    %c8_i32 = arith.constant 8 : i32
    %33 = arith.muli %arg0, %c8_i32 : i32
    %34 = tpu.iota {dimensions = array<i32: 0>} : vector<8x1xi32>
    %35 = vector.broadcast %33 : i32 to vector<8x1xi32>
    %36 = arith.addi %35, %34 : vector<8x1xi32>
    %c8_i32_12 = arith.constant 8 : i32
    %37 = vector.broadcast %c8_i32_12 : i32 to vector<8x1xi32>
    %38 = arith.cmpi slt, %36, %37 : vector<8x1xi32>
    %cst_13 = arith.constant 0.000000e+00 : f32
    %39 = vector.broadcast %cst_13 : f32 to vector<8x1xf32>
    %40 = arith.select %38, %32, %39 : vector<8x1xi1>, vector<8x1xf32>
    %c0_14 = arith.constant 0 : index
    %c0_15 = arith.constant 0 : index
    %41 = vector.load %arg3[%c0_14, %c0_15] : memref<1x1xf32, #tpu.memory_space<vmem>>, vector<1x1xf32>
    %cst_16 = arith.constant dense<0.000000e+00> : vector<1xf32>
    %42 = vector.multi_reduction <add>, %40, %cst_16 [0] : vector<8x1xf32> to vector<1xf32>
    %43 = vector.shape_cast %42 : vector<1xf32> to vector<1x1xf32>
    %44 = arith.addf %41, %43 : vector<1x1xf32>
    %c0_17 = arith.constant 0 : index
    %c0_18 = arith.constant 0 : index
    %45 = vector.load %arg3[%c0_17, %c0_18] : memref<1x1xf32, #tpu.memory_space<vmem>>, vector<1x1xf32>
    tpu.vector_store %arg3[%c0_17, %c0_18], %44 {strides = array<i32>} : memref<1x1xf32, #tpu.memory_space<vmem>>, vector<1x1xf32>,
    %c0_i32_19 = arith.constant 0 : i32
    %46 = arith.cmpi eq, %arg0, %c0_i32_19 : i32
    %47 = arith.extui %46 : i1 to i32
    %c0_i32_20 = arith.constant 0 : i32
    %48 = arith.cmpi ne, %47, %c0_i32_20 : i32
    scf.if %48 {
      %c0_21 = arith.constant 0 : index
      %c0_22 = arith.constant 0 : index
      %49 = vector.load %arg3[%c0_21, %c0_22] : memref<1x1xf32, #tpu.memory_space<vmem>>, vector<1x1xf32>
      %cst_23 = arith.constant 1.250000e-01 : f32
      %50 = vector.broadcast %cst_23 : f32 to vector<1x1xf32>
      %51 = arith.mulf %49, %50 : vector<1x1xf32>
      %c0_24 = arith.constant 0 : index
      %c0_25 = arith.constant 0 : index
      %52 = vector.load %arg3[%c0_24, %c0_25] : memref<1x1xf32, #tpu.memory_space<vmem>>, vector<1x1xf32>
      tpu.vector_store %arg3[%c0_24, %c0_25], %51 {strides = array<i32>} : memref<1x1xf32, #tpu.memory_space<vmem>>, vector<1x1xf32>,
    } else {
    }
    return
  }
  func.func @transform_0(%arg0: i32) -> (i32, i32) {
    %c0_i32 = arith.constant 0 : i32
    %c0_i32_0 = arith.constant 0 : i32
    return %arg0, %c0_i32 : i32, i32
  }
  func.func @transform_1(%arg0: i32) -> (i32, i32) {
    %c0_i32 = arith.constant 0 : i32
    %c0_i32_0 = arith.constant 0 : i32
    return %arg0, %c0_i32 : i32, i32
  }
  func.func @transform_2(%arg0: i32) -> (i32, i32) {
    %c0_i32 = arith.constant 0 : i32
    %c0_i32_0 = arith.constant 0 : i32
    %c0_i32_1 = arith.constant 0 : i32
    return %c0_i32, %c0_i32_0 : i32, i32
  }
}

</mosaic_0001>

<llo_original>
// kernel: tpu_custom_call.1
$region0: #{tpu_custom_call.1}
  #allocation0 [shape = 'u32[]', space=smem, size = 0x4, offset = 0x4, fixed_abs, tag = 'smem constant byte address 0x4 - core index']
  #allocation1 [shape = 'u32[144,128]{1,0:T(1,128)}', space=vmem, size = 0x12000, scoped, tag = 'internal scratch']
  %s0 = inlined_call_operand.vmem [shape: f32[8,60], index: 0, kind: input, shape index: {}]
  %s1 = inlined_call_operand.vmem [shape: s32[8,1], index: 1, kind: input, shape index: {}]
  %s2 = inlined_call_operand.hbm [shape: f32[1,1], index: 2, kind: output, shape index: {}]
  %s3 = sld [smem:[#allocation0]]
  $region26: #{tpu_custom_call.1} parent=0
    _
  %s5 = ssub.s32 1, %s3
  %s6 = scalar_select 0, %s5, %s3
  $region1: #{tpu_custom_call.1} parent=0
    #allocation2 [shape = 'u8[512]{0}', space=vmem, size = 0x400, scoped, tag = 'output window, operand 0, single buffered']
    #allocation3 [shape = 's32[1]{0}', space=sflag, size = 0x4, scoped, tag = 'scoped memory for tpu_custom_call.1']
    %7 = vsyncpa [#allocation3], 0
    // Predicated region
    $region2: #{tpu_custom_call.1} parent=1 // pred_check
      _
    $region3: #{tpu_custom_call.1} parent=1 // pred_check_branch
      %9 = sbr.rel (0) target = $region5
    $region4: #{tpu_custom_call.1} parent=1 // pred_region
      _
    $region5: #{tpu_custom_call.1} parent=1 // pred_fallthru
      _
    // Predicated region
    $region6: #{tpu_custom_call.1} parent=1 // pred_check
      _
    $region7: #{tpu_custom_call.1} parent=1 // pred_check_branch
      %11 = sbr.rel (0) target = $region9
    $region8: #{tpu_custom_call.1} parent=1 // pred_region
      _
    $region9: #{tpu_custom_call.1} parent=1 // pred_fallthru
      _
    %p12 = scmp.eq.s32.totalorder 0, 0
    // Predicated region
    $region10: #{tpu_custom_call.1} parent=1 // pred_check
      %p13 = pneg %p12
    $region11: #{tpu_custom_call.1} parent=1 // pred_check_branch
      %15 = sbr.rel (%p13) target = $region13
    $region12: #{tpu_custom_call.1} parent=1 // pred_region
      %vm16 = vcmask 0
      %17 = vst.msk [vmem:[#allocation2] sm:$0x1] %vm16, 0.0
    $region13: #{tpu_custom_call.1} parent=1 // pred_fallthru
      _
    %v18 = vld [vmem:[%s0] sm:$0xff]
    %v19 = vld [vmem:[%s1] sm:$0xff]
    %vm20 = vcmask 490496
    %v21 = vsel %vm20, %v18, -inf
    %22 = vmax.xlane.f32.xlu0 %v21
    %v23 = vpop.xlane.xlu0 %22
    %v24 = vsub.f32 %v18, %v23
    %v25 = vmul.f32 %v24, 1.442695
    %v26 = vpow.pop %v25
    %v27 = vsel %vm20, %v26, 0.0
    %28 = vadd.xlane.f32.xlu0 %v27
    %v29 = vpop.xlane.xlu0 %28
    %v30 = vlog2.pop %v29
    %v31 = vmul.f32 %v30, 0.6931472
    %v32 = vlaneseq
    %v33 = vand.u32 %v32, 127
    %34 = vset.pattern.permute.xlu0 0
    %35 = vperm.xlu0 %34, %v19
    %v36 = vpop.permute.xlu0 %35
    %vm37 = vcmp.eq.s32.totalorder %v33, %v36
    %v38 = vsel %vm37, %v24, 0.0
    %v39 = vsel %vm20, %v38, 0.0
    %40 = vadd.xlane.f32.xlu0 %v39
    %v41 = vpop.xlane.xlu0 %40
    %v42 = vsel %vm20, %v24, 0.0
    %43 = vadd.xlane.f32.xlu0 %v42
    %v44 = vpop.xlane.xlu0 %43
    %v45 = vmul.f32 %v31, 60.0
    %v46 = vsub.f32 %v44, %v45
    %v47 = vsub.f32 %v41, %v31
    %v48 = vmul.f32 %v46, 0.0016949152
    %v49 = vmul.f32 %v47, 0.89830506
    %v50 = vadd.f32 %v48, %v49
    %v51 = vsub.f32 0.0, %v50
    %s52 = smul.u32 0, 8
    %v53 = vlaneseq
    %v54 = vshrl.u32 %v53, 7
    %v55 = vstv %s52
    %v56 = vadd.s32 %v55, %v54
    %vm57 = vcmp.lt.s32.totalorder %v56, 8
    %v58 = vsel %vm57, %v51, 0.0
    %v59 = vld [vmem:[#allocation2] sm:$0x1]
    %v60 = vrot.slane %v58, 4
    %v61 = vadd.f32 %v58, %v60
    %v62 = vrot.slane %v61, 2
    %v63 = vadd.f32 %v61, %v62
    %v64 = vrot.slane %v63, 1
    %v65 = vadd.f32 %v63, %v64
    %v66 = vadd.f32 %v59, %v65
    %vm67 = vcmask 0
    %68 = vst.msk [vmem:[#allocation2] sm:$0x1] %vm67, %v66
    // Predicated region
    $region14: #{tpu_custom_call.1} parent=1 // pred_check
      %p69 = pneg %p12
    $region15: #{tpu_custom_call.1} parent=1 // pred_check_branch
      %71 = sbr.rel (%p69) target = $region17
    $region16: #{tpu_custom_call.1} parent=1 // pred_region
      %v72 = vld [vmem:[#allocation2] sm:$0x1]
      %v73 = vmul.f32 %v72, 0.125
      %74 = vst.msk [vmem:[#allocation2] sm:$0x1] %vm67, %v73
    $region17: #{tpu_custom_call.1} parent=1 // pred_fallthru
      _
    // Predicated region
    $region18: #{tpu_custom_call.1} parent=1 // pred_check
      _
    $region19: #{tpu_custom_call.1} parent=1 // pred_check_branch
      %76 = sbr.rel (0) target = $region21
    $region20: #{tpu_custom_call.1} parent=1 // pred_region
      %s78 = ssub.s32 16, 16
      %79 = vsyncadd [#allocation3], %s78
      %s81 = sshll.u32 [#allocation2], 4
      %s82 = int_to_ptr.vmem [resolvable:$true] %s81
      %84 = dma.vmem_to_hbm [thread:$0]  %s82, 16, %s2, [#allocation3]
    $region21: #{tpu_custom_call.1} parent=1 // pred_fallthru
      _
    // Predicated region
    $region22: #{tpu_custom_call.1} parent=1 // pred_check
      _
    $region23: #{tpu_custom_call.1} parent=1 // pred_check_branch
      %86 = sbr.rel (0) target = $region25
    $region24: #{tpu_custom_call.1} parent=1 // pred_region
      %87 = dma.done [#allocation3], 16
    $region25: #{tpu_custom_call.1} parent=1 // pred_fallthru
      _
    %88 = vsyncpa [#allocation3], 1

</llo_original>
